<compile_context>
chip_gen: v7x
topology: tpu7x:2x2x1
jax: 0.10.0
libtpu: 0.0.40
codegen_flags: <defaults>
</compile_context>

<pallas_src>
import functools

import jax
import jax.numpy as jnp
from jax.experimental import pallas as pl
from jax.experimental.pallas import tpu as pltpu

BN_EPS = 1e-5
VMEM_LIMIT = 32 * 1024 * 1024


def _round_up(x, m):
    return ((x + m - 1) // m) * m


# --------------------------------------------------------------------------------------
# Pallas kernels: tiled matmul + folded-BN epilogue (+ optional residual add, ReLU)
# --------------------------------------------------------------------------------------

def _matmul_bn_single_kernel(x_ref, w_ref, sb_ref, *rest, relu, has_res):
    # Single K step: no scratch accumulator needed.
    if has_res:
        r_ref, o_ref = rest
    else:
        (o_ref,) = rest
    sb = sb_ref[...]
    y = jnp.dot(x_ref[...], w_ref[...], preferred_element_type=jnp.float32)
    y = y * sb[0:1, :] + sb[1:2, :]
    if has_res:
        y = y + r_ref[...].astype(jnp.float32)
    if relu:
        y = jnp.maximum(y, 0.0)
    o_ref[...] = y.astype(o_ref.dtype)


def _matmul_bn_multi_kernel(x_ref, w_ref, sb_ref, *rest, relu, has_res):
    if has_res:
        r_ref, o_ref, acc_ref = rest
    else:
        o_ref, acc_ref = rest
    k = pl.program_id(2)

    @pl.when(k == 0)
    def _():
        acc_ref[...] = jnp.zeros_like(acc_ref)

    acc_ref[...] += jnp.dot(x_ref[...], w_ref[...], preferred_element_type=jnp.float32)

    @pl.when(k == pl.num_programs(2) - 1)
    def _():
        sb = sb_ref[...]
        y = acc_ref[...] * sb[0:1, :] + sb[1:2, :]
        if has_res:
            y = y + r_ref[...].astype(jnp.float32)
        if relu:
            y = jnp.maximum(y, 0.0)
        o_ref[...] = y.astype(o_ref.dtype)


def _pick_tiles(M, K, N):
    """Return (tm, Mp, tk, tn) for the matmul grid."""
    if M <= 256:
        # Tiny-M layer: single M block, single K step (whole K fits as one block).
        tm, Mp, tk = M, M, K
        if N <= 128 or N % 128 != 0:
            tn = N
        else:
            tn_max = max(128, (1 << 20) // K)        # keep weight block (bf16) <= ~2 MiB
            tn = N if N <= tn_max else 128
            for cand in (1024, 512, 384, 256, 128):  # prefer >=2 N blocks (v7x megacore)
                if N % cand == 0 and cand <= tn_max and N // cand >= 2:
                    tn = cand
                    break
        return tm, Mp, tk, tn

    # Large-M layers (the 7x7 stem and early stages at larger inputs).
    tm, Mp = 128, _round_up(M, 128)
    for c in (256, 224, 192, 160, 128, 112, 96, 80, 72, 64, 56, 48, 40, 32, 24, 16, 8):
        if M % c == 0:
            tm, Mp = c, M
            break
    for c in (512, 256, 128):
        if K % c == 0:
            tk = c
            break
    else:
        tk = K
    for c in (512, 256, 128):
        if N % c == 0:
            tn = c
            break
    else:
        tn = N
    return tm, Mp, tk, tn


@functools.partial(jax.jit, static_argnames=("relu", "out_dtype"))
def matmul_bn(x, w, sb, residual=None, *, relu, out_dtype=jnp.bfloat16):
    """y = maybe_relu((x @ w) * sb[0] + sb[1] [+ residual]).

    x: (M, K) bf16; w: (K, N) bf16; sb: (2, N) f32 (row 0 = scale, row 1 = shift);
    residual: optional (M, N).  Returns (M, N) in out_dtype.
    """
    M, K = x.shape
    Kw, N = w.shape
    assert K == Kw, (K, Kw)
    has_res = residual is not None

    tm, Mp, tk, tn = _pick_tiles(M, K, N)
    if Mp != M:
        x = jnp.pad(x, ((0, Mp - M), (0, 0)))
        if has_res:
            residual = jnp.pad(residual, ((0, Mp - M), (0, 0)))

    ni, nj, nk = Mp // tm, N // tn, K // tk

    if nk == 1:
        kernel = functools.partial(_matmul_bn_single_kernel, relu=relu, has_res=has_res)
        in_specs = [
            pl.BlockSpec((tm, K), lambda i, j: (i, 0)),
            pl.BlockSpec((K, tn), lambda i, j: (0, j)),
            pl.BlockSpec((2, tn), lambda i, j: (0, j)),
        ]
        operands = [x, w, sb]
        if has_res:
            in_specs.append(pl.BlockSpec((tm, tn), lambda i, j: (i, j)))
            operands.append(residual)
        out = pl.pallas_call(
            kernel,
            out_shape=jax.ShapeDtypeStruct((Mp, N), out_dtype),
            grid=(ni, nj),
            in_specs=in_specs,
            out_specs=pl.BlockSpec((tm, tn), lambda i, j: (i, j)),
            compiler_params=pltpu.CompilerParams(
                dimension_semantics=("parallel", "parallel"),
                vmem_limit_bytes=VMEM_LIMIT),
        )(*operands)
    else:
        kernel = functools.partial(_matmul_bn_multi_kernel, relu=relu, has_res=has_res)
        in_specs = [
            pl.BlockSpec((tm, tk), lambda i, j, k: (i, k)),
            pl.BlockSpec((tk, tn), lambda i, j, k: (k, j)),
            pl.BlockSpec((2, tn), lambda i, j, k: (0, j)),
        ]
        operands = [x, w, sb]
        if has_res:
            in_specs.append(pl.BlockSpec((tm, tn), lambda i, j, k: (i, j)))
            operands.append(residual)
        out = pl.pallas_call(
            kernel,
            out_shape=jax.ShapeDtypeStruct((Mp, N), out_dtype),
            grid=(ni, nj, nk),
            in_specs=in_specs,
            out_specs=pl.BlockSpec((tm, tn), lambda i, j, k: (i, j)),
            scratch_shapes=[pltpu.VMEM((tm, tn), jnp.float32)],
            compiler_params=pltpu.CompilerParams(
                dimension_semantics=("parallel", "parallel", "arbitrary"),
                vmem_limit_bytes=VMEM_LIMIT),
        )(*operands)

    if Mp != M:
        out = out[:M]
    return out


# --------------------------------------------------------------------------------------
# Pallas kernels: direct stride-1 3x3 conv (+BN+ReLU)
# --------------------------------------------------------------------------------------

def _conv3x3_s1_full_kernel(xp_ref, w_ref, sb_ref, o_ref, *, H, W):
    # xp_ref: (N, H+2, W+2, Cin) padded input; w_ref: (3, 3*Cin, Cout_tile)
    # sb_ref: (2, Cout_tile); o_ref: (N, H, W, Cout_tile)
    N = xp_ref.shape[0]
    Cin = xp_ref.shape[3]
    Cout = o_ref.shape[3]
    slab = xp_ref[...]
    acc = jnp.zeros((N * H * W, Cout), jnp.float32)
    for dy in range(3):
        xs = jnp.concatenate(
            [slab[:, dy:dy + H, dx:dx + W, :] for dx in range(3)], axis=-1)
        acc = acc + jnp.dot(xs.reshape(N * H * W, 3 * Cin), w_ref[dy],
                            preferred_element_type=jnp.float32)
    sb = sb_ref[...]
    y = acc * sb[0:1, :] + sb[1:2, :]
    y = jnp.maximum(y, 0.0)
    o_ref[...] = y.reshape(N, H, W, Cout).astype(o_ref.dtype)


def _conv3x3_s1_row_kernel(x0_ref, x1_ref, x2_ref, w_ref, sb_ref, o_ref, *, W):
    # x*_ref: (N, 1, W+2, Cin) padded rows y, y+1, y+2 for output row y.
    N = o_ref.shape[0]
    Cout = o_ref.shape[3]
    Cin = x0_ref.shape[3]
    acc = jnp.zeros((N * W, Cout), jnp.float32)
    for dy, xr in enumerate((x0_ref, x1_ref, x2_ref)):
        slab = xr[...]
        xs = jnp.concatenate(
            [slab[:, :, dx:dx + W, :] for dx in range(3)], axis=-1)
        acc = acc + jnp.dot(xs.reshape(N * W, 3 * Cin), w_ref[dy],
                            preferred_element_type=jnp.float32)
    sb = sb_ref[...]
    y = acc * sb[0:1, :] + sb[1:2, :]
    y = jnp.maximum(y, 0.0)
    o_ref[...] = y.reshape(N, 1, W, Cout).astype(o_ref.dtype)


@jax.jit
def conv3x3_s1(x, p):
    """Stride-1, pad-1 3x3 conv + BN + ReLU on an NHWC activation."""
    N, H, W, Cin = x.shape
    w9 = p["w9"]
    Cout = w9.shape[2]
    Wp = W + 2
    xp = jnp.pad(x, ((0, 0), (1, 1), (1, 1), (0, 0)))

    full_image = (N * H * W <= 4096) and (N * (H + 2) * Wp * Cin * 2 <= (256 << 10))
    if full_image:
        # Whole (small) image in one grid step; split Cout so v7x gets >=2 parallel blocks.
        n_co = 2 if Cout % 256 == 0 else 1
        tco = Cout // n_co
        return pl.pallas_call(
            functools.partial(_conv3x3_s1_full_kernel, H=H, W=W),
            grid=(n_co,),
            in_specs=[
                pl.BlockSpec((N, H + 2, Wp, Cin), lambda j: (0, 0, 0, 0)),
                pl.BlockSpec((3, 3 * Cin, tco), lambda j: (0, 0, j)),
                pl.BlockSpec((2, tco), lambda j: (0, j)),
            ],
            out_specs=pl.BlockSpec((N, H, W, tco), lambda j: (0, 0, 0, j)),
            out_shape=jax.ShapeDtypeStruct((N, H, W, Cout), jnp.bfloat16),
            compiler_params=pltpu.CompilerParams(
                dimension_semantics=("parallel",),
                vmem_limit_bytes=VMEM_LIMIT),
        )(xp, w9, p["sb"])

    # Large-activation fallback: grid over output rows.
    return pl.pallas_call(
        functools.partial(_conv3x3_s1_row_kernel, W=W),
        grid=(H,),
        in_specs=[
            pl.BlockSpec((N, 1, Wp, Cin), lambda y: (0, y, 0, 0)),
            pl.BlockSpec((N, 1, Wp, Cin), lambda y: (0, y + 1, 0, 0)),
            pl.BlockSpec((N, 1, Wp, Cin), lambda y: (0, y + 2, 0, 0)),
            pl.BlockSpec((3, 3 * Cin, Cout), lambda y: (0, 0, 0)),
            pl.BlockSpec((2, Cout), lambda y: (0, 0)),
        ],
        out_specs=pl.BlockSpec((N, 1, W, Cout), lambda y: (0, y, 0, 0)),
        out_shape=jax.ShapeDtypeStruct((N, H, W, Cout), jnp.bfloat16),
        compiler_params=pltpu.CompilerParams(
            dimension_semantics=("parallel",),
            vmem_limit_bytes=VMEM_LIMIT),
    )(xp, xp, xp, w9, p["sb"])


# --------------------------------------------------------------------------------------
# Pallas kernel: direct stride-2 3x3 conv (+BN+ReLU) -- no 9x im2col patch matrix in HBM
# --------------------------------------------------------------------------------------

def _conv3x3_s2_row_kernel(xe0_ref, xe1_ref, xe2_ref, xo0_ref, xo1_ref, xo2_ref,
                           w_ref, sb_ref, o_ref, *, Wo):
    # x{e,o}*_ref: (N, 1, Wo+1, Cin) even/odd-column planes of the padded input at padded
    # rows 2y, 2y+1, 2y+2.  Output col wo needs padded cols 2wo, 2wo+1, 2wo+2, i.e.
    # even[wo], odd[wo], even[wo+1].  o_ref: (N, 1, Wo, Cout_tile)
    N = o_ref.shape[0]
    Cout = o_ref.shape[3]
    Cin = xe0_ref.shape[3]
    acc = jnp.zeros((N * Wo, Cout), jnp.float32)
    for dy, (xe, xo) in enumerate(((xe0_ref, xo0_ref), (xe1_ref, xo1_ref),
                                   (xe2_ref, xo2_ref))):
        e = xe[...]
        o = xo[...]
        xs = jnp.concatenate(
            [e[:, :, 0:Wo, :], o[:, :, 0:Wo, :], e[:, :, 1:Wo + 1, :]], axis=-1)
        acc = acc + jnp.dot(xs.reshape(N * Wo, 3 * Cin), w_ref[dy],
                            preferred_element_type=jnp.float32)
    sb = sb_ref[...]
    y = acc * sb[0:1, :] + sb[1:2, :]
    y = jnp.maximum(y, 0.0)
    o_ref[...] = y.reshape(N, 1, Wo, Cout).astype(o_ref.dtype)


@jax.jit
def conv3x3_s2(x, p):
    """Stride-2, pad-1 3x3 conv + BN + ReLU (NHWC), direct row kernel."""
    N, H, W, Cin = x.shape
    assert H % 2 == 0 and W % 2 == 0, (H, W)
    w9 = p["w9"]
    Cout = w9.shape[2]
    Ho, Wo = H // 2, W // 2
    xp = jnp.pad(x, ((0, 0), (1, 1), (1, 1), (0, 0)))
    xe = xp[:, :, 0::2, :]   # padded even columns: (N, H+2, Wo+1, Cin)
    xo = xp[:, :, 1::2, :]   # padded odd  columns: (N, H+2, Wo+1, Cin)

    n_co = 2 if Cout % 256 == 0 else 1
    tco = Cout // n_co
    row_spec = lambda m: pl.BlockSpec((N, 1, Wo + 1, Cin), m)

    return pl.pallas_call(
        functools.partial(_conv3x3_s2_row_kernel, Wo=Wo),
        grid=(Ho, n_co),
        in_specs=[
            row_spec(lambda y, j: (0, 2 * y, 0, 0)),
            row_spec(lambda y, j: (0, 2 * y + 1, 0, 0)),
            row_spec(lambda y, j: (0, 2 * y + 2, 0, 0)),
            row_spec(lambda y, j: (0, 2 * y, 0, 0)),
            row_spec(lambda y, j: (0, 2 * y + 1, 0, 0)),
            row_spec(lambda y, j: (0, 2 * y + 2, 0, 0)),
            pl.BlockSpec((3, 3 * Cin, tco), lambda y, j: (0, 0, j)),
            pl.BlockSpec((2, tco), lambda y, j: (0, j)),
        ],
        out_specs=pl.BlockSpec((N, 1, Wo, tco), lambda y, j: (0, y, 0, j)),
        out_shape=jax.ShapeDtypeStruct((N, Ho, Wo, Cout), jnp.bfloat16),
        compiler_params=pltpu.CompilerParams(
            dimension_semantics=("parallel", "parallel"),
            vmem_limit_bytes=VMEM_LIMIT),
    )(xe, xe, xe, xo, xo, xo, w9, p["sb"])


# --------------------------------------------------------------------------------------
# Pallas kernel: 3x3 / stride-2 maxpool
# --------------------------------------------------------------------------------------

def _maxpool_row_kernel(x0_ref, x1_ref, x2_ref, o_ref, *, W):
    r = jnp.maximum(jnp.maximum(x0_ref[...], x1_ref[...]), x2_ref[...])    # (N,1,W+2,C)
    m = jnp.maximum(jnp.maximum(r[:, :, 0:W, :], r[:, :, 1:W + 1, :]), r[:, :, 2:W + 2, :])
    o_ref[...] = m


@jax.jit
def maxpool_3x3_s2(x):
    N, H, W, C = x.shape
    Ho = (H - 1) // 2 + 1
    Wp = W + 2
    xp = jnp.pad(x, ((0, 0), (1, 1), (1, 1), (0, 0)), constant_values=-jnp.inf)
    m1 = pl.pallas_call(
        functools.partial(_maxpool_row_kernel, W=W),
        grid=(Ho,),
        in_specs=[
            pl.BlockSpec((N, 1, Wp, C), lambda y: (0, 2 * y, 0, 0)),
            pl.BlockSpec((N, 1, Wp, C), lambda y: (0, 2 * y + 1, 0, 0)),
            pl.BlockSpec((N, 1, Wp, C), lambda y: (0, 2 * y + 2, 0, 0)),
        ],
        out_specs=pl.BlockSpec((N, 1, W, C), lambda y: (0, y, 0, 0)),
        out_shape=jax.ShapeDtypeStruct((N, Ho, W, C), x.dtype),
        compiler_params=pltpu.CompilerParams(dimension_semantics=("parallel",)),
    )(xp, xp, xp)
    return m1[:, :, 0::2, :]   # stride-2 column subsample (small XLA strided slice)


# --------------------------------------------------------------------------------------
# Pallas kernel: global average pool (channel-tiled)
# --------------------------------------------------------------------------------------

def _avgpool_kernel(x_ref, o_ref):
    o_ref[...] = jnp.mean(x_ref[...].astype(jnp.float32), axis=1)


@jax.jit
def global_avgpool(x):
    N, H, W, C = x.shape
    xr = x.reshape(N, H * W, C)
    tc = 512 if C % 512 == 0 else C
    return pl.pallas_call(
        _avgpool_kernel,
        grid=(C // tc,),
        in_specs=[pl.BlockSpec((N, H * W, tc), lambda j: (0, 0, j))],
        out_specs=pl.BlockSpec((N, tc), lambda j: (0, j)),
        out_shape=jax.ShapeDtypeStruct((N, C), jnp.float32),
        compiler_params=pltpu.CompilerParams(dimension_semantics=("parallel",)),
    )(xr)


# --------------------------------------------------------------------------------------
# JAX glue: im2col (7x7 stem only) and conv wrappers
# --------------------------------------------------------------------------------------

def _im2col_nhwc(x, kh, kw, stride, pad):
    N, H, W, C = x.shape
    Ho = (H + 2 * pad - kh) // stride + 1
    Wo = (W + 2 * pad - kw) // stride + 1
    xp = jnp.pad(x, ((0, 0), (pad, pad), (pad, pad), (0, 0)))
    cols = []
    for i in range(kh):
        for j in range(kw):
            cols.append(xp[:, i:i + stride * (Ho - 1) + 1:stride,
                           j:j + stride * (Wo - 1) + 1:stride, :])
    patches = jnp.concatenate(cols, axis=-1)
    return patches.reshape(N * Ho * Wo, kh * kw * C), (N, Ho, Wo)


def conv1x1_bn(x, p, relu, residual=None):
    N, H, W, C = x.shape
    xm = x.reshape(N * H * W, C)
    res = residual.reshape(N * H * W, residual.shape[-1]) if residual is not None else None
    y = matmul_bn(xm, p["w"], p["sb"], res, relu=relu)
    return y.reshape(N, H, W, p["w"].shape[1])


@jax.jit
def conv7x7_s2(x, p):
    cols, (N, Ho, Wo) = _im2col_nhwc(x, 7, 7, 2, 3)
    y = matmul_bn(cols, p["w"], p["sb"], relu=True)
    return y.reshape(N, Ho, Wo, p["w"].shape[1])


# --------------------------------------------------------------------------------------
# Parameter init (deterministic, mirrors the PyTorch module's __init__), packed for TPU
# --------------------------------------------------------------------------------------

def _pack_matmul_weight(w):
    """torch (Cout, Cin, kh, kw) -> (kh*kw*Cin, Cout) bf16 (no padding)."""
    cout, cin, kh, kw = w.shape
    return jnp.transpose(w, (2, 3, 1, 0)).reshape(kh * kw * cin, cout).astype(jnp.bfloat16)


def _pack_conv3x3_weight(w):
    """torch (Cout, Cin, 3, 3) -> (3, 3*Cin, Cout) bf16 (row-major over (dy, dx, cin))."""
    cout, cin, _, _ = w.shape
    return jnp.transpose(w, (2, 3, 1, 0)).reshape(3, 3 * cin, cout).astype(jnp.bfloat16)


def _bn_sb(c):
    gamma = jnp.ones((c,), jnp.float32)
    beta = jnp.zeros((c,), jnp.float32)
    mean = jnp.zeros((c,), jnp.float32)
    var = jnp.ones((c,), jnp.float32)
    scale = gamma / jnp.sqrt(var + BN_EPS)
    shift = beta - mean * scale
    return jnp.stack([scale, shift], axis=0)   # (2, c)


def init_params(key):
    counter = [0]

    def nk():
        counter[0] += 1
        return jax.random.fold_in(key, counter[0])

    def conv_w(cout, cin, kh, kw):
        # kaiming_normal_(mode='fan_out', nonlinearity='relu')
        std = (2.0 / (cout * kh * kw)) ** 0.5
        return jax.random.normal(nk(), (cout, cin, kh, kw), jnp.float32) * std

    params = {}
    params["conv1"] = {"w": _pack_matmul_weight(conv_w(64, 3, 7, 7)), "sb": _bn_sb(64)}

    blocks = []
    inplanes = 64
    for planes, nblocks, stage_stride in [(64, 3, 1), (128, 4, 2), (256, 6, 2), (512, 3, 2)]:
        for bidx in range(nblocks):
            stride = stage_stride if bidx == 0 else 1
            width = planes               # base_width=64, groups=1
            out_c = planes * 4           # Bottleneck.expansion
            blk = {"stride": stride}
            blk["conv1"] = {"w": _pack_matmul_weight(conv_w(width, inplanes, 1, 1)),
                            "sb": _bn_sb(width)}
            blk["conv2"] = {"w9": _pack_conv3x3_weight(conv_w(width, width, 3, 3)),
                            "sb": _bn_sb(width)}
            blk["conv3"] = {"w": _pack_matmul_weight(conv_w(out_c, width, 1, 1)),
                            "sb": _bn_sb(out_c)}
            if bidx == 0 and (stride != 1 or inplanes != out_c):
                blk["down"] = {"w": _pack_matmul_weight(conv_w(out_c, inplanes, 1, 1)),
                               "sb": _bn_sb(out_c)}
            blocks.append(blk)
            inplanes = out_c
    params["blocks"] = blocks

    # final_layers: 7 conv1x1 heads, zero-initialized weights & biases, stacked channel-wise
    # into one matmul (output cols 0..256 valid, padded to 384 lanes).
    head_dims = [80, 64, 80, 3, 27, 2, 1]   # sums to 257
    nh = sum(head_dims)
    nhp = _round_up(nh, 128)
    params["head"] = {
        "w": jnp.zeros((2048, nhp), jnp.bfloat16),
        "sb": jnp.concatenate([jnp.ones((1, nhp), jnp.float32),
                               jnp.zeros((1, nhp), jnp.float32)], axis=0),
    }
    params["head_valid"] = nh
    return params


# --------------------------------------------------------------------------------------
# Forward
# --------------------------------------------------------------------------------------

def bottleneck_forward(x, blk):
    out = conv1x1_bn(x, blk["conv1"], relu=True)
    if blk["stride"] == 1:
        out = conv3x3_s1(out, blk["conv2"])
    else:
        out = conv3x3_s2(out, blk["conv2"])

    if "down" in blk:
        xs = x if blk["stride"] == 1 else x[:, ::2, ::2, :]
        identity = conv1x1_bn(xs, blk["down"], relu=False)
    else:
        identity = x

    # conv3 + BN + residual add + ReLU, all fused in the matmul epilogue.
    return conv1x1_bn(out, blk["conv3"], relu=True, residual=identity)


def recon_net_forward(params, x_nchw):
    x = jnp.transpose(x_nchw.astype(jnp.float32), (0, 2, 3, 1)).astype(jnp.bfloat16)
    x = conv7x7_s2(x, params["conv1"])
    x = maxpool_3x3_s2(x)
    for blk in params["blocks"]:
        x = bottleneck_forward(x, blk)
    feat = global_avgpool(x)                                        # (N, 2048) f32
    h = params["head"]
    out = matmul_bn(feat.astype(jnp.bfloat16), h["w"], h["sb"],
                    relu=False, out_dtype=jnp.float32)
    return out[:, :params["head_valid"]]


# --------------------------------------------------------------------------------------

if __name__ == "__main__":
    key = jax.random.PRNGKey(0)

    # ---- unit check 1: single-K-step matmul + BN + residual + ReLU ---------------------
    xt = jax.random.normal(jax.random.fold_in(key, 100), (64, 96)).astype(jnp.bfloat16)
    wt = jax.random.normal(jax.random.fold_in(key, 101), (96, 128)).astype(jnp.bfloat16)
    st = jax.random.normal(jax.random.fold_in(key, 102), (1, 128)) * 0.1 + 1.0
    bt = jax.random.normal(jax.random.fold_in(key, 103), (1, 128)) * 0.1
    rt = jax.random.normal(jax.random.fold_in(key, 104), (64, 128)).astype(jnp.bfloat16)
    got = matmul_bn(xt, wt, jnp.concatenate([st, bt], axis=0), rt,
                    relu=True, out_dtype=jnp.float32)
    ref = jnp.maximum(jnp.dot(xt.astype(jnp.float32), wt.astype(jnp.float32)) * st + bt
                      + rt.astype(jnp.float32), 0.0)
    got = jax.block_until_ready(got)
    assert bool(jnp.allclose(got, ref, atol=5e-2, rtol=5e-2)), float(jnp.max(jnp.abs(got - ref)))

    # ---- unit check 2: multi-K-step matmul path ----------------------------------------
    xt2 = jax.random.normal(jax.random.fold_in(key, 110), (512, 1024)).astype(jnp.bfloat16)
    wt2 = (jax.random.normal(jax.random.fold_in(key, 111), (1024, 256)) * 0.05
           ).astype(jnp.bfloat16)
    sbt2 = jnp.concatenate([jnp.ones((1, 256), jnp.float32),
                            jnp.zeros((1, 256), jnp.float32)], axis=0)
    got2 = matmul_bn(xt2, wt2, sbt2, relu=False, out_dtype=jnp.float32)
    ref2 = jnp.dot(xt2.astype(jnp.float32), wt2.astype(jnp.float32))
    got2 = jax.block_until_ready(got2)
    assert bool(jnp.allclose(got2, ref2, atol=5e-2, rtol=5e-2)), \
        float(jnp.max(jnp.abs(got2 - ref2)))

    # ---- unit check 3: direct stride-1 3x3 conv + BN + ReLU ----------------------------
    xc = jax.random.normal(jax.random.fold_in(key, 120), (2, 8, 8, 64)).astype(jnp.bfloat16)
    wc = jax.random.normal(jax.random.fold_in(key, 121), (64, 64, 3, 3)) * 0.1
    sc = jax.random.normal(jax.random.fold_in(key, 122), (64,)) * 0.1 + 1.0
    bc = jax.random.normal(jax.random.fold_in(key, 123), (64,)) * 0.1
    pc = {"w9": _pack_conv3x3_weight(wc), "sb": jnp.stack([sc, bc], axis=0)}
    got3 = conv3x3_s1(xc, pc).astype(jnp.float32)
    wq = wc.astype(jnp.bfloat16).astype(jnp.float32)
    ref3 = jax.lax.conv_general_dilated(
        xc.astype(jnp.float32), jnp.transpose(wq, (2, 3, 1, 0)),
        window_strides=(1, 1), padding=((1, 1), (1, 1)),
        dimension_numbers=("NHWC", "HWIO", "NHWC"))
    ref3 = jnp.maximum(ref3 * sc + bc, 0.0)
    got3 = jax.block_until_ready(got3)
    assert bool(jnp.allclose(got3, ref3, atol=1e-1, rtol=1e-1)), \
        float(jnp.max(jnp.abs(got3 - ref3)))

    # ---- unit check 4: direct stride-2 3x3 conv + BN + ReLU ----------------------------
    xs2 = jax.random.normal(jax.random.fold_in(key, 130), (2, 8, 8, 128)).astype(jnp.bfloat16)
    ws2 = jax.random.normal(jax.random.fold_in(key, 131), (128, 128, 3, 3)) * 0.05
    ss2 = jax.random.normal(jax.random.fold_in(key, 132), (128,)) * 0.1 + 1.0
    bs2 = jax.random.normal(jax.random.fold_in(key, 133), (128,)) * 0.1
    ps2 = {"w9": _pack_conv3x3_weight(ws2), "sb": jnp.stack([ss2, bs2], axis=0)}
    got4 = conv3x3_s2(xs2, ps2).astype(jnp.float32)
    wq2 = ws2.astype(jnp.bfloat16).astype(jnp.float32)
    ref4 = jax.lax.conv_general_dilated(
        xs2.astype(jnp.float32), jnp.transpose(wq2, (2, 3, 1, 0)),
        window_strides=(2, 2), padding=((1, 1), (1, 1)),
        dimension_numbers=("NHWC", "HWIO", "NHWC"))
    ref4 = jnp.maximum(ref4 * ss2 + bs2, 0.0)
    got4 = jax.block_until_ready(got4)
    assert bool(jnp.allclose(got4, ref4, atol=1e-1, rtol=1e-1)), \
        float(jnp.max(jnp.abs(got4 - ref4)))

    # ---- end-to-end forward ------------------------------------------------------------
    params = init_params(jax.random.fold_in(key, 123))
    x = jax.random.normal(jax.random.fold_in(key, 7), (2, 3, 32, 32), jnp.float32)
    out = recon_net_forward(params, x)
    out = jax.block_until_ready(out)

    assert out.shape == (2, 257), out.shape
    assert bool(jnp.all(jnp.isfinite(out)))
    print("KERNEL_OK")
</pallas_src>

<mosaic_0001>
module attributes {stable_mosaic.version = 11 : i64} {
  func.func @_matmul_bn_single_kernel(%arg0: i32, %arg1: i32, %arg2: memref<64x96xbf16, #tpu.memory_space<vmem>>, %arg3: memref<96x128xbf16, #tpu.memory_space<vmem>>, %arg4: memref<2x128xf32, #tpu.memory_space<vmem>>, %arg5: memref<64x128xbf16, #tpu.memory_space<vmem>>, %arg6: memref<64x128xf32, #tpu.memory_space<vmem>>) attributes {dimension_semantics = [#tpu.dimension_semantics<parallel>, #tpu.dimension_semantics<parallel>], iteration_bounds = array<i64: 1, 1>, scalar_prefetch = 0 : i64, scratch_operands = 0 : i64, tpu.core_type = #tpu.core_type<tc>, window_params = [{transform_indices = @transform_0, window_bounds = array<i64: 64, 96>}, {transform_indices = @transform_1, window_bounds = array<i64: 96, 128>}, {transform_indices = @transform_2, window_bounds = array<i64: 2, 128>}, {transform_indices = @transform_3, window_bounds = array<i64: 64, 128>}, {transform_indices = @transform_4, window_bounds = array<i64: 64, 128>}]} {
    %c0 = arith.constant 0 : index
    %c0_0 = arith.constant 0 : index
    %0 = vector.load %arg4[%c0, %c0_0] : memref<2x128xf32, #tpu.memory_space<vmem>>, vector<2x128xf32>
    %c0_1 = arith.constant 0 : index
    %c0_2 = arith.constant 0 : index
    %1 = vector.load %arg2[%c0_1, %c0_2] : memref<64x96xbf16, #tpu.memory_space<vmem>>, vector<64x96xbf16>
    %c0_3 = arith.constant 0 : index
    %c0_4 = arith.constant 0 : index
    %2 = vector.load %arg3[%c0_3, %c0_4] : memref<96x128xbf16, #tpu.memory_space<vmem>>, vector<96x128xbf16>
    %cst = arith.constant dense<0.000000e+00> : vector<64x128xf32>
    %3 = tpu.matmul %1, %2, %cst {dimension_numbers = #tpu.dot_dimension_numbers<[1], [0], [0], [1], [0, 0, 1, 1], [], []>} : vector<64x96xbf16>, vector<96x128xbf16>, vector<64x128xf32> -> vector<64x128xf32>
    %4 = vector.extract_strided_slice %0 {offsets = [0, 0], sizes = [1, 128], strides = [1, 1]} : vector<2x128xf32> to vector<1x128xf32>
    %5 = vector.broadcast %4 : vector<1x128xf32> to vector<64x128xf32>
    %6 = arith.mulf %3, %5 : vector<64x128xf32>
    %7 = vector.extract_strided_slice %0 {offsets = [1, 0], sizes = [1, 128], strides = [1, 1]} : vector<2x128xf32> to vector<1x128xf32>
    %8 = vector.broadcast %7 : vector<1x128xf32> to vector<64x128xf32>
    %9 = arith.addf %6, %8 : vector<64x128xf32>
    %c0_5 = arith.constant 0 : index
    %c0_6 = arith.constant 0 : index
    %10 = vector.load %arg5[%c0_5, %c0_6] : memref<64x128xbf16, #tpu.memory_space<vmem>>, vector<64x128xbf16>
    %11 = arith.extf %10 : vector<64x128xbf16> to vector<64x128xf32>
    %12 = arith.addf %9, %11 : vector<64x128xf32>
    %cst_7 = arith.constant 0.000000e+00 : f32
    %13 = vector.broadcast %cst_7 : f32 to vector<64x128xf32>
    %14 = arith.maximumf %12, %13 : vector<64x128xf32>
    %c0_8 = arith.constant 0 : index
    %c0_9 = arith.constant 0 : index
    %15 = vector.load %arg6[%c0_8, %c0_9] : memref<64x128xf32, #tpu.memory_space<vmem>>, vector<64x128xf32>
    tpu.vector_store %arg6[%c0_8, %c0_9], %14 {strides = array<i32>} : memref<64x128xf32, #tpu.memory_space<vmem>>, vector<64x128xf32>,
    return
  }
  func.func @transform_0(%arg0: i32, %arg1: i32) -> (i32, i32) {
    %c0_i32 = arith.constant 0 : i32
    %c0_i32_0 = arith.constant 0 : i32
    return %arg0, %c0_i32 : i32, i32
  }
  func.func @transform_1(%arg0: i32, %arg1: i32) -> (i32, i32) {
    %c0_i32 = arith.constant 0 : i32
    %c0_i32_0 = arith.constant 0 : i32
    return %c0_i32, %arg1 : i32, i32
  }
  func.func @transform_2(%arg0: i32, %arg1: i32) -> (i32, i32) {
    %c0_i32 = arith.constant 0 : i32
    %c0_i32_0 = arith.constant 0 : i32
    return %c0_i32, %arg1 : i32, i32
  }
  func.func @transform_3(%arg0: i32, %arg1: i32) -> (i32, i32) {
    %c0_i32 = arith.constant 0 : i32
    return %arg0, %arg1 : i32, i32
  }
  func.func @transform_4(%arg0: i32, %arg1: i32) -> (i32, i32) {
    %c0_i32 = arith.constant 0 : i32
    return %arg0, %arg1 : i32, i32
  }
}

</mosaic_0001>

<llo_original>
// kernel: matmul_bn.1
$region0: #{matmul_bn.1}
  #allocation0 [shape = 'u32[]', space=smem, size = 0x4, offset = 0x4, fixed_abs, tag = 'smem constant byte address 0x4 - core index']
  #allocation1 [shape = 'u32[144,128]{1,0:T(1,128)}', space=vmem, size = 0x12000, scoped, tag = 'internal scratch']
  %s0 = inlined_call_operand.hbm [shape: bf16[64,96], index: 0, kind: input, shape index: {}]
  %s1 = inlined_call_operand.hbm [shape: bf16[96,128], index: 1, kind: input, shape index: {}]
  %s2 = inlined_call_operand.vmem [shape: f32[2,128], index: 2, kind: input, shape index: {}]
  %s3 = inlined_call_operand.hbm [shape: bf16[64,128], index: 3, kind: input, shape index: {}]
  %s4 = inlined_call_operand.hbm [shape: f32[64,128], index: 4, kind: output, shape index: {}]
  %s5 = sld [smem:[#allocation0]]
  $region38: #{matmul_bn.1} parent=0
    _
  %s7 = ssub.s32 1, %s5
  %s8 = scalar_select 0, %s7, %s5
  $region1: #{matmul_bn.1} parent=0
    #allocation2 [shape = 'u8[16384]{0}', space=vmem, size = 0x4000, scoped, tag = 'input window, operand 0, single buffered']
    #allocation3 [shape = 's32[1]{0}', space=sflag, size = 0x4, scoped, tag = 'scoped memory for matmul_bn.1']
    #allocation4 [shape = 's32[1]{0}', space=sflag, size = 0x4, scoped, tag = 'scoped memory for matmul_bn.1']
    #allocation5 [shape = 'u8[24576]{0}', space=vmem, size = 0x6000, scoped, tag = 'input window, operand 1, single buffered']
    #allocation6 [shape = 's32[1]{0}', space=sflag, size = 0x4, scoped, tag = 'scoped memory for matmul_bn.1']
    #allocation7 [shape = 'u8[16384]{0}', space=vmem, size = 0x4000, scoped, tag = 'input window, operand 3, single buffered']
    #allocation8 [shape = 'u8[32768]{0}', space=vmem, size = 0x8000, scoped, tag = 'output window, operand 0, single buffered']
    %9 = vsyncpa [#allocation3], 0
    %10 = vsyncpa [#allocation6], 0
    %11 = vsyncpa [#allocation4], 0
    // Predicated region
    $region2: #{matmul_bn.1} parent=1 // pred_check
      _
    $region3: #{matmul_bn.1} parent=1 // pred_check_branch
      %13 = sbr.rel (0) target = $region5
    $region4: #{matmul_bn.1} parent=1 // pred_region
      %s15 = ssub.s32 512, 512
      %16 = vsyncadd [#allocation3], %s15
      %s17 = sshll.u32 [#allocation2], 4
      %s18 = int_to_ptr.vmem [resolvable:$true] %s17
      %23 = dma.hbm_to_vmem [thread:$0]  %s0, 512, %s18, [#allocation3], 64, 64, 4
    $region5: #{matmul_bn.1} parent=1 // pred_fallthru
      _
    // Predicated region
    $region6: #{matmul_bn.1} parent=1 // pred_check
      _
    $region7: #{matmul_bn.1} parent=1 // pred_check_branch
      %25 = sbr.rel (0) target = $region9
    $region8: #{matmul_bn.1} parent=1 // pred_region
      %s27 = ssub.s32 768, 768
      %28 = vsyncadd [#allocation6], %s27
      %s29 = sshll.u32 [#allocation5], 4
      %s30 = int_to_ptr.vmem [resolvable:$true] %s29
      %35 = dma.hbm_to_vmem [thread:$0]  %s1, 768, %s30, [#allocation6], 64, 64, 4
    $region9: #{matmul_bn.1} parent=1 // pred_fallthru
      _
    // Predicated region
    $region10: #{matmul_bn.1} parent=1 // pred_check
      _
    $region11: #{matmul_bn.1} parent=1 // pred_check_branch
      %37 = sbr.rel (0) target = $region13
    $region12: #{matmul_bn.1} parent=1 // pred_region
      _
    $region13: #{matmul_bn.1} parent=1 // pred_fallthru
      _
    // Predicated region
    $region14: #{matmul_bn.1} parent=1 // pred_check
      _
    $region15: #{matmul_bn.1} parent=1 // pred_check_branch
      %39 = sbr.rel (0) target = $region17
    $region16: #{matmul_bn.1} parent=1 // pred_region
      %s41 = ssub.s32 512, 512
      %42 = vsyncadd [#allocation6], %s41
      %s43 = sshll.u32 [#allocation7], 4
      %s44 = int_to_ptr.vmem [resolvable:$true] %s43
      %49 = dma.hbm_to_vmem [thread:$0]  %s3, 512, %s44, [#allocation6], 64, 64, 4
    $region17: #{matmul_bn.1} parent=1 // pred_fallthru
      _
    // Predicated region
    $region18: #{matmul_bn.1} parent=1 // pred_check
      _
    $region19: #{matmul_bn.1} parent=1 // pred_check_branch
      %51 = sbr.rel (0) target = $region21
    $region20: #{matmul_bn.1} parent=1 // pred_region
      %52 = dma.done [#allocation3], 512
    $region21: #{matmul_bn.1} parent=1 // pred_fallthru
      _
    // Predicated region
    $region22: #{matmul_bn.1} parent=1 // pred_check
      _
    $region23: #{matmul_bn.1} parent=1 // pred_check_branch
      %54 = sbr.rel (0) target = $region25
    $region24: #{matmul_bn.1} parent=1 // pred_region
      %55 = dma.done [#allocation6], 768
    $region25: #{matmul_bn.1} parent=1 // pred_fallthru
      _
    // Predicated region
    $region26: #{matmul_bn.1} parent=1 // pred_check
      _
    $region27: #{matmul_bn.1} parent=1 // pred_check_branch
      %57 = sbr.rel (0) target = $region29
    $region28: #{matmul_bn.1} parent=1 // pred_region
      %58 = dma.done [#allocation6], 512
    $region29: #{matmul_bn.1} parent=1 // pred_fallthru
      _
    %v60 = vld [vmem:[%s2] sm:$0x3]
    %v61 = vld [vmem:[#allocation2] sm:$0xf]
    %v62 = vld [vmem:[#allocation2 + $0x4] sm:$0xf]
    %v63 = vld [vmem:[#allocation2 + $0x8] sm:$0xf]
    %v64 = vld [vmem:[#allocation2 + $0xc] sm:$0xf]
    %v65 = vld [vmem:[#allocation2 + $0x10] sm:$0xf]
    %v66 = vld [vmem:[#allocation2 + $0x14] sm:$0xf]
    %v67 = vld [vmem:[#allocation2 + $0x18] sm:$0xf]
    %v68 = vld [vmem:[#allocation2 + $0x1c] sm:$0xf]
    %v69 = vld [vmem:[#allocation5] sm:$0xf]
    %v70 = vld [vmem:[#allocation5 + $0x4] sm:$0xf]
    %v71 = vld [vmem:[#allocation5 + $0x8] sm:$0xf]
    %v72 = vld [vmem:[#allocation5 + $0xc] sm:$0xf]
    %v73 = vld [vmem:[#allocation5 + $0x10] sm:$0xf]
    %v74 = vld [vmem:[#allocation5 + $0x14] sm:$0xf]
    %v75 = vld [vmem:[#allocation5 + $0x18] sm:$0xf]
    %v76 = vld [vmem:[#allocation5 + $0x1c] sm:$0xf]
    %v77 = vld [vmem:[#allocation5 + $0x20] sm:$0xf]
    %v78 = vld [vmem:[#allocation5 + $0x24] sm:$0xf]
    %v79 = vld [vmem:[#allocation5 + $0x28] sm:$0xf]
    %v80 = vld [vmem:[#allocation5 + $0x2c] sm:$0xf]
    %v89 = vunpack.c.l.b16 %v61
    %v90 = vunpack.c.l.b16 %v62
    %v91 = vunpack.c.l.b16 %v63
    %v92 = vunpack.c.l.b16 %v64
    %v93 = vunpack.c.l.b16 %v65
    %v94 = vunpack.c.l.b16 %v66
    %v95 = vunpack.c.l.b16 %v67
    %v96 = vunpack.c.l.b16 %v68
    %v97 = vpack.c.b16 %v90, %v89
    %v98 = vpack.c.b16 %v92, %v91
    %v99 = vpack.c.b16 %v94, %v93
    %v100 = vpack.c.b16 %v96, %v95
    %v113 = vunpack.c.l.b16 %v69
    %v114 = vunpack.c.l.b16 %v70
    %v115 = vunpack.c.l.b16 %v71
    %v116 = vunpack.c.l.b16 %v72
    %v117 = vunpack.c.l.b16 %v73
    %v118 = vunpack.c.l.b16 %v74
    %v119 = vunpack.c.l.b16 %v75
    %v120 = vunpack.c.l.b16 %v76
    %v121 = vunpack.c.l.b16 %v77
    %v122 = vunpack.c.l.b16 %v78
    %v123 = vunpack.c.l.b16 %v79
    %v124 = vunpack.c.l.b16 %v80
    %v125 = vpack.c.b16 %v114, %v113
    %v126 = vpack.c.b16 %v116, %v115
    %v127 = vpack.c.b16 %v118, %v117
    %v128 = vpack.c.b16 %v120, %v119
    %v129 = vpack.c.b16 %v122, %v121
    %v130 = vpack.c.b16 %v124, %v123
    %vm137 = vcmask 785408
    %v139 = vsel %vm137, %v97, 0
    %v142 = vsel %vm137, %v98, 0
    %v145 = vsel %vm137, %v99, 0
    %v148 = vsel %vm137, %v100, 0
    %150 = vmatprep.subr.bf16.mxu0 0
    %151 = vmatpush1.bf16.msra.mxu0 %v125
    %152 = vmatprep.subr.bf16.mxu0 0
    %153 = vmatpush1.bf16.msra.mxu0 %v126
    %154 = vmatprep.subr.bf16.mxu0 0
    %155 = vmatpush1.bf16.msra.mxu0 %v127
    %156 = vmatprep.subr.bf16.mxu0 0
    %157 = vmatpush1.bf16.msra.mxu0 %v128
    %158 = vmatprep.subr.bf16.mxu0 0
    %159 = vmatpush1.bf16.msra.mxu0 %v129
    %160 = vmatprep.subr.bf16.mxu0 0
    %161 = vmatpush1.bf16.msra.mxu0 %v130
    %162 = vmatprep.subr.bf16.mxu0 0
    %163 = vmatpush1.bf16.msra.mxu0 0
    %164 = vmatprep.subr.bf16.mxu0 0
    %165 = vmatpush1.bf16.msra.mxu0 0
    %166 = vmatprep.subr.bf16.mxu0 0
    %167 = vmatpush1.bf16.msra.mxu0 0
    %168 = vmatprep.subr.bf16.mxu0 0
    %169 = vmatpush1.bf16.msra.mxu0 0
    %170 = vmatprep.subr.bf16.mxu0 0
    %171 = vmatpush1.bf16.msra.mxu0 0
    %172 = vmatprep.subr.bf16.mxu0 0
    %173 = vmatpush1.bf16.msra.mxu0 0
    %174 = vmatprep.subr.bf16.mxu0 0
    %175 = vmatpush1.bf16.msra.mxu0 0
    %176 = vmatprep.subr.bf16.mxu0 0
    %177 = vmatpush1.bf16.msra.mxu0 0
    %178 = vmatprep.subr.bf16.mxu0 0
    %179 = vmatpush1.bf16.msra.mxu0 0
    %180 = vmatprep.subr.bf16.mxu0 0
    %181 = vmatpush1.bf16.msra.mxu0 0
    %182 = vmatprep.mubr.bf16.mxu0 0
    %183 = vmatmul.mubr.bf16.gmra.mrb[0].mxu0 %v139
    %v184 = vpop.f32.mrb[0].mxu0
    %v185 = vadd.f32 0.0, %v184
    %v186 = vpop.f32.mrb[0].mxu0
    %v187 = vpop.f32.mrb[0].mxu0
    %v188 = vadd.f32 0.0, %v187
    %v189 = vpop.f32.mrb[0].mxu0
    %190 = vmatprep.mubr.bf16.mxu0 0
    %191 = vmatmul.mubr.bf16.gmra.mrb[0].mxu0 %v142
    %v192 = vpop.f32.mrb[0].mxu0
    %v193 = vadd.f32 0.0, %v192
    %v194 = vpop.f32.mrb[0].mxu0
    %v195 = vpop.f32.mrb[0].mxu0
    %v196 = vadd.f32 0.0, %v195
    %v197 = vpop.f32.mrb[0].mxu0
    %198 = vmatprep.mubr.bf16.mxu0 0
    %199 = vmatmul.mubr.bf16.gmra.mrb[0].mxu0 %v145
    %v200 = vpop.f32.mrb[0].mxu0
    %v201 = vadd.f32 0.0, %v200
    %v202 = vpop.f32.mrb[0].mxu0
    %v203 = vpop.f32.mrb[0].mxu0
    %v204 = vadd.f32 0.0, %v203
    %v205 = vpop.f32.mrb[0].mxu0
    %206 = vmatprep.mubr.bf16.mxu0 0
    %207 = vmatmul.mubr.bf16.gmra.mrb[0].mxu0 %v148
    %v208 = vpop.f32.mrb[0].mxu0
    %v209 = vadd.f32 0.0, %v208
    %v210 = vpop.f32.mrb[0].mxu0
    %v211 = vpop.f32.mrb[0].mxu0
    %v212 = vadd.f32 0.0, %v211
    %v213 = vpop.f32.mrb[0].mxu0
    %214 = vdwg.mxu0
    %v215 = vlaneseq
    %v216 = vshrl.u32 %v215, 7
    %v217 = vsub.s32 0, %v216
    %v218 = vrot.slane %v60, %v217
    %v219 = vmul.f32 %v185, %v218
    %v220 = vmul.f32 %v188, %v218
    %v221 = vmul.f32 %v193, %v218
    %v222 = vmul.f32 %v196, %v218
    %v223 = vmul.f32 %v201, %v218
    %v224 = vmul.f32 %v204, %v218
    %v225 = vmul.f32 %v209, %v218
    %v226 = vmul.f32 %v212, %v218
    %v227 = vlaneseq
    %v228 = vshrl.u32 %v227, 7
    %v229 = vsub.s32 1, %v228
    %v230 = vrot.slane %v60, %v229
    %v231 = vadd.f32 %v219, %v230
    %v232 = vadd.f32 %v220, %v230
    %v233 = vadd.f32 %v221, %v230
    %v234 = vadd.f32 %v222, %v230
    %v235 = vadd.f32 %v223, %v230
    %v236 = vadd.f32 %v224, %v230
    %v237 = vadd.f32 %v225, %v230
    %v238 = vadd.f32 %v226, %v230
    %v239 = vld [vmem:[#allocation7] sm:$0xf]
    %v240 = vld [vmem:[#allocation7 + $0x4] sm:$0xf]
    %v241 = vld [vmem:[#allocation7 + $0x8] sm:$0xf]
    %v242 = vld [vmem:[#allocation7 + $0xc] sm:$0xf]
    %v243 = vld [vmem:[#allocation7 + $0x10] sm:$0xf]
    %v244 = vld [vmem:[#allocation7 + $0x14] sm:$0xf]
    %v245 = vld [vmem:[#allocation7 + $0x18] sm:$0xf]
    %v246 = vld [vmem:[#allocation7 + $0x1c] sm:$0xf]
    %v247 = vunpack.c.l.bf16 %v239
    %v248 = vunpack.c.l.bf16 %v240
    %v249 = vunpack.c.l.bf16 %v241
    %v250 = vunpack.c.l.bf16 %v242
    %v251 = vunpack.c.l.bf16 %v243
    %v252 = vunpack.c.l.bf16 %v244
    %v253 = vunpack.c.l.bf16 %v245
    %v254 = vunpack.c.l.bf16 %v246
    %v255 = vadd.f32 %v231, %v247
    %v256 = vadd.f32 %v232, %v248
    %v257 = vadd.f32 %v233, %v249
    %v258 = vadd.f32 %v234, %v250
    %v259 = vadd.f32 %v235, %v251
    %v260 = vadd.f32 %v236, %v252
    %v261 = vadd.f32 %v237, %v253
    %v262 = vadd.f32 %v238, %v254
    %v263 = vmax.f32 %v255, 0.0
    %v264 = vmax.f32 %v256, 0.0
    %v265 = vmax.f32 %v257, 0.0
    %v266 = vmax.f32 %v258, 0.0
    %v267 = vmax.f32 %v259, 0.0
    %v268 = vmax.f32 %v260, 0.0
    %v269 = vmax.f32 %v261, 0.0
    %v270 = vmax.f32 %v262, 0.0
    %271 = vst [vmem:[#allocation8] sm:$0xff] %v263
    %272 = vst [vmem:[#allocation8 + $0x8] sm:$0xff] %v264
    %273 = vst [vmem:[#allocation8 + $0x10] sm:$0xff] %v265
    %274 = vst [vmem:[#allocation8 + $0x18] sm:$0xff] %v266
    %275 = vst [vmem:[#allocation8 + $0x20] sm:$0xff] %v267
    %276 = vst [vmem:[#allocation8 + $0x28] sm:$0xff] %v268
    %277 = vst [vmem:[#allocation8 + $0x30] sm:$0xff] %v269
    %278 = vst [vmem:[#allocation8 + $0x38] sm:$0xff] %v270
    // Predicated region
    $region30: #{matmul_bn.1} parent=1 // pred_check
      _
    $region31: #{matmul_bn.1} parent=1 // pred_check_branch
      %280 = sbr.rel (0) target = $region33
    $region32: #{matmul_bn.1} parent=1 // pred_region
      %s282 = ssub.s32 1024, 1024
      %283 = vsyncadd [#allocation4], %s282
      %s284 = sshll.u32 [#allocation8], 4
      %s285 = int_to_ptr.vmem [resolvable:$true] %s284
      %290 = dma.vmem_to_hbm [thread:$0]  %s285, 1024, %s4, [#allocation4], 128, 128, 8
    $region33: #{matmul_bn.1} parent=1 // pred_fallthru
      _
    // Predicated region
    $region34: #{matmul_bn.1} parent=1 // pred_check
      _
    $region35: #{matmul_bn.1} parent=1 // pred_check_branch
      %292 = sbr.rel (0) target = $region37
    $region36: #{matmul_bn.1} parent=1 // pred_region
      %293 = dma.done [#allocation4], 1024
    $region37: #{matmul_bn.1} parent=1 // pred_fallthru
      _
    %294 = vsyncpa [#allocation3], 1
    %295 = vsyncpa [#allocation6], 1
    %296 = vsyncpa [#allocation4], 1

</llo_original>
